<compile_context>
chip_gen: v6e
topology: v6e:2x2x1
jax: 0.10.0
libtpu: 0.0.40
codegen_flags: <defaults>
</compile_context>

<pallas_src>
import jax
import jax.numpy as jnp
import numpy as np
from jax.experimental import pallas as pl
from jax.experimental.pallas import tpu as pltpu


def _swish_kernel(x_ref, o_ref):
    # Elementwise: o = x * sigmoid(x). Compute in f32 regardless of input dtype
    # (v5e has no bf16 VPU/EUP), cast back to the output dtype.
    x = x_ref[...].astype(jnp.float32)
    o_ref[...] = (x * jax.nn.sigmoid(x)).astype(o_ref.dtype)


def _round_up(a, b):
    return (a + b - 1) // b * b


def _is_newer_gen():
    # v6e / v7x: faster HBM (and 2 TCs on v7x) -> larger tiles pay off and there
    # is VMEM headroom for them. v5e / unknown stay conservative so the
    # double-buffered footprint fits the 16 MiB default scoped VMEM.
    try:
        kind = jax.devices()[0].device_kind.lower()
    except Exception:
        return False
    return any(t in kind for t in ("v6", "v7", "7x"))


def swish(x):
    """Applies Swish (x * sigmoid(x)) elementwise to an arbitrarily-shaped array."""
    orig_shape = x.shape
    dtype = x.dtype
    n = int(x.size)
    if n == 0:
        return x

    itemsize = jnp.dtype(dtype).itemsize
    sublane = max(8, 32 // itemsize)          # 8 (f32), 16 (bf16), 32 (int8/fp8)
    newer = _is_newer_gen()
    target_tile_bytes = (4 << 20) if newer else (2 << 20)

    # ---- choose a lane-dense 2D view (fast path: pure reshape, no copies) ----
    lanes = None
    for cand in (512, 256, 128):
        if n % cand == 0 and (n // cand) % sublane == 0:
            lanes = cand
            break

    padded = lanes is None
    if padded:
        lanes = 512
        rows = _round_up(pl.cdiv(n, lanes), sublane)
        # swish(0) == 0, so zero padding is harmless; it is sliced off below.
        flat = jnp.pad(x.reshape(-1), (0, rows * lanes - n))
        x2d = flat.reshape(rows, lanes)
    else:
        rows = n // lanes
        x2d = x.reshape(rows, lanes)           # metadata-only

    # ---- pick the row tile (dtype-aware: ~equal bytes per grid step) ----
    max_block_rows = max(
        sublane, (target_tile_bytes // (lanes * itemsize)) // sublane * sublane
    )
    total_bytes = n * itemsize
    if rows <= max_block_rows:
        if total_bytes >= (2 << 20):
            # >=2 even grid steps so dimension_semantics=("parallel",) can shard
            # across v7x's 2 TensorCores; harmless on single-TC v5e/v6e.
            block_rows = _round_up(pl.cdiv(rows, 2), sublane)
        else:
            block_rows = rows                  # single full-array block
    else:
        block_rows = max_block_rows

    grid = (pl.cdiv(rows, block_rows),)        # last block may be partial

    compiler_params = pltpu.CompilerParams(
        dimension_semantics=("parallel",),
        vmem_limit_bytes=(48 << 20) if newer else None,
    )

    out2d = pl.pallas_call(
        _swish_kernel,
        out_shape=jax.ShapeDtypeStruct((rows, lanes), dtype),
        grid_spec=pltpu.PrefetchScalarGridSpec(
            num_scalar_prefetch=0,
            grid=grid,
            in_specs=[pl.BlockSpec((block_rows, lanes), lambda i: (i, 0))],
            out_specs=pl.BlockSpec((block_rows, lanes), lambda i: (i, 0)),
        ),
        compiler_params=compiler_params,
        cost_estimate=pl.CostEstimate(
            flops=5 * n,
            transcendentals=n,
            bytes_accessed=2 * n * itemsize,
        ),
    )(x2d)

    if padded:
        return out2d.reshape(-1)[:n].reshape(orig_shape)
    return out2d.reshape(orig_shape)


if __name__ == "__main__":
    key = jax.random.PRNGKey(0)

    # Small shape consistent with the module's elementwise forward (fast path).
    x = jax.random.normal(key, (2, 4, 16, 16), jnp.float32)
    out = swish(x)
    jax.block_until_ready(out)
    ref = x * jax.nn.sigmoid(x)
    np.testing.assert_allclose(np.asarray(out), np.asarray(ref), rtol=1e-5, atol=1e-6)

    # Odd shape to exercise the padded / partial-block path.
    x2 = jax.random.normal(jax.random.PRNGKey(1), (3, 5, 7), jnp.float32)
    out2 = swish(x2)
    jax.block_until_ready(out2)
    ref2 = x2 * jax.nn.sigmoid(x2)
    np.testing.assert_allclose(np.asarray(out2), np.asarray(ref2), rtol=1e-5, atol=1e-6)

    print("KERNEL_OK")
</pallas_src>

<mosaic_0001>
module attributes {stable_mosaic.version = 11 : i64} {
  func.func @_swish_kernel(%arg0: i32, %arg1: memref<8x256xf32, #tpu.memory_space<vmem>>, %arg2: memref<8x256xf32, #tpu.memory_space<vmem>>) attributes {dimension_semantics = [#tpu.dimension_semantics<parallel>], iteration_bounds = array<i64: 1>, scalar_prefetch = 0 : i64, scratch_operands = 0 : i64, tpu.core_type = #tpu.core_type<tc>, window_params = [{transform_indices = @transform_0, window_bounds = array<i64: 8, 256>}, {transform_indices = @transform_1, window_bounds = array<i64: 8, 256>}]} {
    %c0 = arith.constant 0 : index
    %c0_0 = arith.constant 0 : index
    %0 = vector.load %arg1[%c0, %c0_0] : memref<8x256xf32, #tpu.memory_space<vmem>>, vector<8x256xf32>
    %1 = arith.negf %0 : vector<8x256xf32>
    %2 = math.exp %1 : vector<8x256xf32>
    %cst = arith.constant 1.000000e+00 : f32
    %3 = vector.broadcast %cst : f32 to vector<8x256xf32>
    %4 = arith.addf %3, %2 : vector<8x256xf32>
    %5 = arith.divf %3, %4 : vector<8x256xf32>
    %6 = arith.mulf %0, %5 : vector<8x256xf32>
    %c0_1 = arith.constant 0 : index
    %c0_2 = arith.constant 0 : index
    %7 = vector.load %arg2[%c0_1, %c0_2] : memref<8x256xf32, #tpu.memory_space<vmem>>, vector<8x256xf32>
    tpu.vector_store %arg2[%c0_1, %c0_2], %6 {strides = array<i32>} : memref<8x256xf32, #tpu.memory_space<vmem>>, vector<8x256xf32>,
    return
  }
  func.func @transform_0(%arg0: i32) -> (i32, i32) {
    %c0_i32 = arith.constant 0 : i32
    %c0_i32_0 = arith.constant 0 : i32
    return %arg0, %c0_i32 : i32, i32
  }
  func.func @transform_1(%arg0: i32) -> (i32, i32) {
    %c0_i32 = arith.constant 0 : i32
    %c0_i32_0 = arith.constant 0 : i32
    return %arg0, %c0_i32 : i32, i32
  }
}

</mosaic_0001>

<llo_original>
// kernel: tpu_custom_call.1
$region0: #{tpu_custom_call.1}
  #allocation0 [shape = 'u32[]', space=smem, size = 0x4, offset = 0x4, fixed_abs, tag = 'smem constant byte address 0x4 - core index']
  #allocation1 [shape = 'u32[144,128]{1,0:T(1,128)}', space=vmem, size = 0x12000, scoped, tag = 'internal scratch']
  %s0 = inlined_call_operand.hbm [shape: f32[8,256], index: 0, kind: input, shape index: {}]
  %s1 = inlined_call_operand.hbm [shape: f32[8,256], index: 1, kind: output, shape index: {}]
  %s2 = sld [smem:[#allocation0]]
  $region18: #{tpu_custom_call.1} parent=0
    _
  %s4 = ssub.s32 1, %s2
  %s5 = scalar_select 0, %s4, %s2
  $region1: #{tpu_custom_call.1} parent=0
    #allocation2 [shape = 'u8[8192]{0}', space=vmem, size = 0x2000, scoped, tag = 'input window, operand 0, single buffered']
    #allocation3 [shape = 's32[1]{0}', space=sflag, size = 0x4, scoped, tag = 'scoped memory for tpu_custom_call.1']
    #allocation4 [shape = 's32[1]{0}', space=sflag, size = 0x4, scoped, tag = 'scoped memory for tpu_custom_call.1']
    #allocation5 [shape = 'u8[8192]{0}', space=vmem, size = 0x2000, scoped, tag = 'output window, operand 0, single buffered']
    %6 = vsyncpa [#allocation3], 0
    %7 = vsyncpa [#allocation4], 0
    // Predicated region
    $region2: #{tpu_custom_call.1} parent=1 // pred_check
      _
    $region3: #{tpu_custom_call.1} parent=1 // pred_check_branch
      %9 = sbr.rel (0) target = $region5
    $region4: #{tpu_custom_call.1} parent=1 // pred_region
      %s11 = ssub.s32 256, 256
      %12 = vsyncadd [#allocation3], %s11
      %s14 = sshll.u32 [#allocation2], 4
      %s15 = int_to_ptr.vmem [resolvable:$true] %s14
      %17 = dma.hbm_to_vmem [thread:$0]  %s0, 256, %s15, [#allocation3]
    $region5: #{tpu_custom_call.1} parent=1 // pred_fallthru
      _
    // Predicated region
    $region6: #{tpu_custom_call.1} parent=1 // pred_check
      _
    $region7: #{tpu_custom_call.1} parent=1 // pred_check_branch
      %19 = sbr.rel (0) target = $region9
    $region8: #{tpu_custom_call.1} parent=1 // pred_region
      %20 = dma.done [#allocation3], 256
    $region9: #{tpu_custom_call.1} parent=1 // pred_fallthru
      _
    %v21 = vld [vmem:[#allocation2] sm:$0xff]
    %v22 = vld [vmem:[#allocation2 + $0x8] sm:$0xff]
    %v23 = vxor.u32 %v21, 2147483648
    %v24 = vxor.u32 %v22, 2147483648
    %v25 = vmul.f32 %v23, 1.442695
    %v26 = vpow.pop %v25
    %v27 = vmul.f32 %v24, 1.442695
    %v28 = vpow.pop %v27
    %v29 = vadd.f32 %v26, 1.0
    %v30 = vadd.f32 %v28, 1.0
    %v31 = vrcp.pop %v29
    %v32 = vmul.f32 1.0, %v31
    %v33 = vrcp.pop %v30
    %v34 = vmul.f32 1.0, %v33
    %v35 = vmul.f32 %v21, %v32
    %v36 = vmul.f32 %v22, %v34
    %37 = vst [vmem:[#allocation5] sm:$0xff] %v35
    %38 = vst [vmem:[#allocation5 + $0x8] sm:$0xff] %v36
    // Predicated region
    $region10: #{tpu_custom_call.1} parent=1 // pred_check
      _
    $region11: #{tpu_custom_call.1} parent=1 // pred_check_branch
      %40 = sbr.rel (0) target = $region13
    $region12: #{tpu_custom_call.1} parent=1 // pred_region
      %s42 = ssub.s32 256, 256
      %43 = vsyncadd [#allocation4], %s42
      %s45 = sshll.u32 [#allocation5], 4
      %s46 = int_to_ptr.vmem [resolvable:$true] %s45
      %48 = dma.vmem_to_hbm [thread:$0]  %s46, 256, %s1, [#allocation4]
    $region13: #{tpu_custom_call.1} parent=1 // pred_fallthru
      _
    // Predicated region
    $region14: #{tpu_custom_call.1} parent=1 // pred_check
      _
    $region15: #{tpu_custom_call.1} parent=1 // pred_check_branch
      %50 = sbr.rel (0) target = $region17
    $region16: #{tpu_custom_call.1} parent=1 // pred_region
      %51 = dma.done [#allocation4], 256
    $region17: #{tpu_custom_call.1} parent=1 // pred_fallthru
      _
    %52 = vsyncpa [#allocation3], 1
    %53 = vsyncpa [#allocation4], 1

</llo_original>
